<compile_context>
chip_gen: v7x
topology: tpu7x:2x2x1
jax: 0.10.0
libtpu: 0.0.40
codegen_flags: <defaults>
</compile_context>

<pallas_src>
import math

import jax
import jax.numpy as jnp
from jax.experimental import pallas as pl
from jax.experimental.pallas import tpu as pltpu


# ---------------------------------------------------------------- kernels ---

def _add_pe_groups_kernel(x_ref, pe_ref, o_ref):
    """Lane-dense path. x_ref/o_ref: (TS, GB*D); pe_ref: (TS, D) in x.dtype."""
    d = pe_ref.shape[-1]
    n_groups = x_ref.shape[-1] // d          # static
    pe = pe_ref[...]
    for g in range(n_groups):                # static unroll; no (TS, GB*D) temp
        sl = slice(g * d, (g + 1) * d)       # lane-aligned (D % 128 == 0)
        o_ref[:, sl] = (x_ref[:, sl] + pe).astype(o_ref.dtype)


def _add_pe_bcast_kernel(x_ref, pe_ref, o_ref):
    """3-D fallback. x_ref/o_ref: (TS, B, D); pe_ref: (TS, 1, D)."""
    # Broadcast over the batch (sublane) axis: stride-0, no XLU shuffle.
    o_ref[...] = (x_ref[...] + pe_ref[...]).astype(o_ref.dtype)


# ------------------------------------------------------------ pe buffer -----

def make_pe_table(d_model: int, max_len: int = 5000) -> jnp.ndarray:
    """Mirror of SimplePositionalEncoding.__init__ -> (max_len, 1, d_model)."""
    position = jnp.arange(0, max_len, dtype=jnp.float32)[:, None]
    div_term = jnp.exp(
        jnp.arange(0, d_model, 2, dtype=jnp.float32) * (-math.log(10000.0) / d_model)
    )
    pe = jnp.zeros((max_len, d_model), dtype=jnp.float32)
    pe = pe.at[:, 0::2].set(jnp.sin(position * div_term))
    pe = pe.at[:, 1::2].set(jnp.cos(position * div_term)[:, : d_model // 2])
    return pe[:, None, :]                    # unsqueeze(0).transpose(0, 1)


# ------------------------------------------------------------- wrapper ------

_VMEM_BUDGET = 24 * 1024 * 1024      # honest per-step working set (incl. double buffers)
_VMEM_LIMIT = 48 * 1024 * 1024       # explicit scoped-VMEM limit (<= v7x 64 MiB physical)


def _round_down8(n: int) -> int:
    return max(8, (n // 8) * 8)


def simple_positional_encoding(x: jnp.ndarray, pe: jnp.ndarray) -> jnp.ndarray:
    """x: (S, B, D); pe: (max_len, 1, D) float32.  Returns x + pe[:S] in x.dtype.

    NOTE: output dtype follows x.dtype (PyTorch would promote bf16 x + f32
    buffer to f32); intentional to keep activation memory traffic minimal.
    """
    S, B, D = x.shape
    max_len = pe.shape[0]
    itemsize = jnp.dtype(x.dtype).itemsize

    # Pre-cast pe once: halves pe HBM/DMA traffic for bf16 x, keeps the add in x.dtype.
    pe2 = pe.reshape(max_len, D).astype(x.dtype)

    cost = pl.CostEstimate(
        flops=S * B * D,
        transcendentals=0,
        bytes_accessed=2 * S * B * D * itemsize + S * D * itemsize,
    )

    if D % 128 == 0:
        # -------- Path A: lane-dense (S, B*D); grid = (row tiles, batch-group tiles)
        x2 = x.reshape(S, B * D)             # free, contiguous view

        def bytes_per_row(gb):
            # double-buffered x-in + out blocks, double-buffered pe block,
            # plus the per-group (TS, D) add temporary.
            return (4 * gb * D + 2 * D + 2 * D) * itemsize

        gb = B                               # batches per lane block
        while gb > 1 and bytes_per_row(gb) * 8 > _VMEM_BUDGET:
            gb = (gb + 1) // 2               # tile the lane axis instead of overflowing VMEM

        ts = min(S, 1024, max(1, _VMEM_BUDGET // bytes_per_row(gb)))
        if S >= 8:
            ts = _round_down8(ts)
            if S >= 16:
                # Prefer >=2 row tiles (v7x: both TensorCores) when tiles stay >=256 rows.
                half = ((-(-S // 2) + 7) // 8) * 8
                if half >= 256:
                    ts = min(ts, half)
        else:
            ts = S                           # tiny S: full-extent row block

        lane_blk = gb * D
        grid = (pl.cdiv(S, ts), pl.cdiv(B, gb))

        out2 = pl.pallas_call(
            _add_pe_groups_kernel,
            out_shape=jax.ShapeDtypeStruct((S, B * D), x.dtype),
            grid_spec=pltpu.PrefetchScalarGridSpec(
                num_scalar_prefetch=0,
                grid=grid,
                in_specs=[
                    pl.BlockSpec((ts, lane_blk), lambda i, j: (i, j)),
                    pl.BlockSpec((ts, D), lambda i, j: (i, 0)),
                ],
                out_specs=pl.BlockSpec((ts, lane_blk), lambda i, j: (i, j)),
            ),
            compiler_params=pltpu.CompilerParams(
                dimension_semantics=("parallel", "parallel"),
                vmem_limit_bytes=_VMEM_LIMIT,
            ),
            cost_estimate=cost,
        )(x2, pe2)
        return out2.reshape(S, B, D)

    # -------- Path B: D not a multiple of 128 -> 3-D blocks, sublane broadcast
    pe3 = pe2.reshape(max_len, 1, D)
    bytes_per_row = (4 * B * D + 2 * D + B * D) * itemsize
    ts = max(1, min(S, 1024, _VMEM_BUDGET // bytes_per_row))
    grid = (pl.cdiv(S, ts),)

    return pl.pallas_call(
        _add_pe_bcast_kernel,
        out_shape=jax.ShapeDtypeStruct((S, B, D), x.dtype),
        grid_spec=pltpu.PrefetchScalarGridSpec(
            num_scalar_prefetch=0,
            grid=grid,
            in_specs=[
                pl.BlockSpec((ts, B, D), lambda i: (i, 0, 0)),
                pl.BlockSpec((ts, 1, D), lambda i: (i, 0, 0)),
            ],
            out_specs=pl.BlockSpec((ts, B, D), lambda i: (i, 0, 0)),
        ),
        compiler_params=pltpu.CompilerParams(
            dimension_semantics=("parallel",),
            vmem_limit_bytes=_VMEM_LIMIT,
        ),
        cost_estimate=cost,
    )(x, pe3)


# --------------------------------------------------------------- driver -----

if __name__ == "__main__":
    d_model = 512
    max_len = 20
    seq_len = 8
    batch = 2

    key = jax.random.PRNGKey(0)
    x = jax.random.normal(key, (seq_len, batch, d_model), dtype=jnp.float32)

    pe = make_pe_table(d_model, max_len)

    out = simple_positional_encoding(x, pe)
    out = jax.block_until_ready(out)

    # Reference check in plain JAX (same math as the PyTorch forward).
    ref = x + pe[:seq_len]
    assert out.shape == (seq_len, batch, d_model)
    assert jnp.allclose(out, ref, atol=1e-6), "mismatch vs reference"

    print("KERNEL_OK")
</pallas_src>

<mosaic_0001>
module attributes {stable_mosaic.version = 11 : i64} {
  func.func @_add_pe_groups_kernel(%arg0: i32, %arg1: i32, %arg2: memref<8x1024xf32, #tpu.memory_space<vmem>>, %arg3: memref<8x512xf32, #tpu.memory_space<vmem>>, %arg4: memref<8x1024xf32, #tpu.memory_space<vmem>>) attributes {dimension_semantics = [#tpu.dimension_semantics<parallel>, #tpu.dimension_semantics<parallel>], iteration_bounds = array<i64: 1, 1>, scalar_prefetch = 0 : i64, scratch_operands = 0 : i64, tpu.core_type = #tpu.core_type<tc>, window_params = [{transform_indices = @transform_0, window_bounds = array<i64: 8, 1024>}, {transform_indices = @transform_1, window_bounds = array<i64: 8, 512>}, {transform_indices = @transform_2, window_bounds = array<i64: 8, 1024>}]} {
    %c0 = arith.constant 0 : index
    %c0_0 = arith.constant 0 : index
    %0 = vector.load %arg3[%c0, %c0_0] : memref<8x512xf32, #tpu.memory_space<vmem>>, vector<8x512xf32>
    %c0_1 = arith.constant 0 : index
    %c0_2 = arith.constant 0 : index
    %1 = vector.load %arg2[%c0_1, %c0_2] : memref<8x1024xf32, #tpu.memory_space<vmem>>, vector<8x512xf32>
    %2 = arith.addf %1, %0 : vector<8x512xf32>
    %c0_3 = arith.constant 0 : index
    %c0_4 = arith.constant 0 : index
    %3 = vector.load %arg4[%c0_3, %c0_4] : memref<8x1024xf32, #tpu.memory_space<vmem>>, vector<8x512xf32>
    tpu.vector_store %arg4[%c0_3, %c0_4], %2 {strides = array<i32>} : memref<8x1024xf32, #tpu.memory_space<vmem>>, vector<8x512xf32>,
    %c0_5 = arith.constant 0 : index
    %c512 = arith.constant 512 : index
    %4 = vector.load %arg2[%c0_5, %c512] : memref<8x1024xf32, #tpu.memory_space<vmem>>, vector<8x512xf32>
    %5 = arith.addf %4, %0 : vector<8x512xf32>
    %c0_6 = arith.constant 0 : index
    %c512_7 = arith.constant 512 : index
    %6 = vector.load %arg4[%c0_6, %c512_7] : memref<8x1024xf32, #tpu.memory_space<vmem>>, vector<8x512xf32>
    tpu.vector_store %arg4[%c0_6, %c512_7], %5 {strides = array<i32>} : memref<8x1024xf32, #tpu.memory_space<vmem>>, vector<8x512xf32>,
    return
  }
  func.func @transform_0(%arg0: i32, %arg1: i32) -> (i32, i32) {
    %c0_i32 = arith.constant 0 : i32
    return %arg0, %arg1 : i32, i32
  }
  func.func @transform_1(%arg0: i32, %arg1: i32) -> (i32, i32) {
    %c0_i32 = arith.constant 0 : i32
    %c0_i32_0 = arith.constant 0 : i32
    return %arg0, %c0_i32 : i32, i32
  }
  func.func @transform_2(%arg0: i32, %arg1: i32) -> (i32, i32) {
    %c0_i32 = arith.constant 0 : i32
    return %arg0, %arg1 : i32, i32
  }
}

</mosaic_0001>

<llo_original>
// kernel: tpu_custom_call.1
$region0: #{tpu_custom_call.1}
  #allocation0 [shape = 'u32[]', space=smem, size = 0x4, offset = 0x4, fixed_abs, tag = 'smem constant byte address 0x4 - core index']
  #allocation1 [shape = 'u32[144,128]{1,0:T(1,128)}', space=vmem, size = 0x12000, scoped, tag = 'internal scratch']
  %s0 = inlined_call_operand.hbm [shape: f32[8,1024], index: 0, kind: input, shape index: {}]
  %s1 = inlined_call_operand.hbm [shape: f32[20,512], index: 1, kind: input, shape index: {}]
  %s2 = inlined_call_operand.hbm [shape: f32[8,1024], index: 2, kind: output, shape index: {}]
  %s3 = sld [smem:[#allocation0]]
  $region26: #{tpu_custom_call.1} parent=0
    _
  %s5 = ssub.s32 1, %s3
  %s6 = scalar_select 0, %s5, %s3
  $region1: #{tpu_custom_call.1} parent=0
    #allocation2 [shape = 'u8[32768]{0}', space=vmem, size = 0x8000, scoped, tag = 'input window, operand 0, single buffered']
    #allocation3 [shape = 's32[1]{0}', space=sflag, size = 0x4, scoped, tag = 'scoped memory for tpu_custom_call.1']
    #allocation4 [shape = 's32[1]{0}', space=sflag, size = 0x4, scoped, tag = 'scoped memory for tpu_custom_call.1']
    #allocation5 [shape = 'u8[16384]{0}', space=vmem, size = 0x4000, scoped, tag = 'input window, operand 1, single buffered']
    #allocation6 [shape = 's32[1]{0}', space=sflag, size = 0x4, scoped, tag = 'scoped memory for tpu_custom_call.1']
    #allocation7 [shape = 'u8[32768]{0}', space=vmem, size = 0x8000, scoped, tag = 'output window, operand 0, single buffered']
    %7 = vsyncpa [#allocation3], 0
    %8 = vsyncpa [#allocation6], 0
    %9 = vsyncpa [#allocation4], 0
    // Predicated region
    $region2: #{tpu_custom_call.1} parent=1 // pred_check
      _
    $region3: #{tpu_custom_call.1} parent=1 // pred_check_branch
      %11 = sbr.rel (0) target = $region5
    $region4: #{tpu_custom_call.1} parent=1 // pred_region
      %s13 = ssub.s32 1024, 1024
      %14 = vsyncadd [#allocation3], %s13
      %s16 = sshll.u32 [#allocation2], 4
      %s17 = int_to_ptr.vmem [resolvable:$true] %s16
      %19 = dma.hbm_to_vmem [thread:$0]  %s0, 1024, %s17, [#allocation3]
    $region5: #{tpu_custom_call.1} parent=1 // pred_fallthru
      _
    // Predicated region
    $region6: #{tpu_custom_call.1} parent=1 // pred_check
      _
    $region7: #{tpu_custom_call.1} parent=1 // pred_check_branch
      %21 = sbr.rel (0) target = $region9
    $region8: #{tpu_custom_call.1} parent=1 // pred_region
      %s23 = ssub.s32 512, 512
      %24 = vsyncadd [#allocation6], %s23
      %s26 = sshll.u32 [#allocation5], 4
      %s27 = int_to_ptr.vmem [resolvable:$true] %s26
      %29 = dma.hbm_to_vmem [thread:$0]  %s1, 512, %s27, [#allocation6]
    $region9: #{tpu_custom_call.1} parent=1 // pred_fallthru
      _
    // Predicated region
    $region10: #{tpu_custom_call.1} parent=1 // pred_check
      _
    $region11: #{tpu_custom_call.1} parent=1 // pred_check_branch
      %31 = sbr.rel (0) target = $region13
    $region12: #{tpu_custom_call.1} parent=1 // pred_region
      %32 = dma.done [#allocation3], 1024
    $region13: #{tpu_custom_call.1} parent=1 // pred_fallthru
      _
    // Predicated region
    $region14: #{tpu_custom_call.1} parent=1 // pred_check
      _
    $region15: #{tpu_custom_call.1} parent=1 // pred_check_branch
      %34 = sbr.rel (0) target = $region17
    $region16: #{tpu_custom_call.1} parent=1 // pred_region
      %35 = dma.done [#allocation6], 512
    $region17: #{tpu_custom_call.1} parent=1 // pred_fallthru
      _
    %v36 = vld [vmem:[#allocation5] sm:$0xff]
    %v37 = vld [vmem:[#allocation5 + $0x8] sm:$0xff]
    %v38 = vld [vmem:[#allocation5 + $0x10] sm:$0xff]
    %v39 = vld [vmem:[#allocation5 + $0x18] sm:$0xff]
    %v40 = vld [vmem:[#allocation2] sm:$0xff]
    %v41 = vld [vmem:[#allocation2 + $0x8] sm:$0xff]
    %v42 = vld [vmem:[#allocation2 + $0x10] sm:$0xff]
    %v43 = vld [vmem:[#allocation2 + $0x18] sm:$0xff]
    %v44 = vadd.f32 %v40, %v36
    %v45 = vadd.f32 %v41, %v37
    %v46 = vadd.f32 %v42, %v38
    %v47 = vadd.f32 %v43, %v39
    %48 = vst [vmem:[#allocation7] sm:$0xff] %v44
    %49 = vst [vmem:[#allocation7 + $0x8] sm:$0xff] %v45
    %50 = vst [vmem:[#allocation7 + $0x10] sm:$0xff] %v46
    %51 = vst [vmem:[#allocation7 + $0x18] sm:$0xff] %v47
    %v52 = vld [vmem:[#allocation2 + $0x20] sm:$0xff]
    %v53 = vld [vmem:[#allocation2 + $0x28] sm:$0xff]
    %v54 = vld [vmem:[#allocation2 + $0x30] sm:$0xff]
    %v55 = vld [vmem:[#allocation2 + $0x38] sm:$0xff]
    %v56 = vadd.f32 %v52, %v36
    %v57 = vadd.f32 %v53, %v37
    %v58 = vadd.f32 %v54, %v38
    %v59 = vadd.f32 %v55, %v39
    %60 = vst [vmem:[#allocation7 + $0x20] sm:$0xff] %v56
    %61 = vst [vmem:[#allocation7 + $0x28] sm:$0xff] %v57
    %62 = vst [vmem:[#allocation7 + $0x30] sm:$0xff] %v58
    %63 = vst [vmem:[#allocation7 + $0x38] sm:$0xff] %v59
    // Predicated region
    $region18: #{tpu_custom_call.1} parent=1 // pred_check
      _
    $region19: #{tpu_custom_call.1} parent=1 // pred_check_branch
      %65 = sbr.rel (0) target = $region21
    $region20: #{tpu_custom_call.1} parent=1 // pred_region
      %s67 = ssub.s32 1024, 1024
      %68 = vsyncadd [#allocation4], %s67
      %s70 = sshll.u32 [#allocation7], 4
      %s71 = int_to_ptr.vmem [resolvable:$true] %s70
      %73 = dma.vmem_to_hbm [thread:$0]  %s71, 1024, %s2, [#allocation4]
    $region21: #{tpu_custom_call.1} parent=1 // pred_fallthru
      _
    // Predicated region
    $region22: #{tpu_custom_call.1} parent=1 // pred_check
      _
    $region23: #{tpu_custom_call.1} parent=1 // pred_check_branch
      %75 = sbr.rel (0) target = $region25
    $region24: #{tpu_custom_call.1} parent=1 // pred_region
      %76 = dma.done [#allocation4], 1024
    $region25: #{tpu_custom_call.1} parent=1 // pred_fallthru
      _
    %77 = vsyncpa [#allocation3], 1
    %78 = vsyncpa [#allocation6], 1
    %79 = vsyncpa [#allocation4], 1

</llo_original>
